<compile_context>
chip_gen: v7x
topology: tpu7x:2x2x1
jax: 0.10.0
libtpu: 0.0.40
codegen_flags: <defaults>
</compile_context>

<pallas_src>
import functools

import jax
import jax.numpy as jnp
from jax.experimental import pallas as pl
from jax.experimental.pallas import tpu as pltpu


def _round_up(x, m):
    return ((x + m - 1) // m) * m


def _pad_cols(a, target):
    return a if a.shape[-1] == target else jnp.pad(a, ((0, 0), (0, target - a.shape[-1])))


# ---------------------------------------------------------------------------
# Kernels
# ---------------------------------------------------------------------------
def _linear_kernel(x_ref, w_ref, b_ref, o_ref):
    # x_ref: (TM, Hp)  w_ref: (Hp, Op)  b_ref: (1, Op)  o_ref: (TM, Op)
    acc = jnp.dot(x_ref[...], w_ref[...], preferred_element_type=jnp.float32)
    acc = acc + b_ref[...].astype(jnp.float32)
    o_ref[...] = acc.astype(o_ref.dtype)


def _mlp_kernel(x_ref, w1_ref, b1_ref, w2_ref, b2_ref, o_ref):
    # Fused Linear -> ReLU -> (Dropout eval = identity) -> Linear.
    # x_ref: (TM, Hp)  w1_ref: (Hp, Dp)  b1_ref: (1, Dp)
    # w2_ref: (Dp, Op) b2_ref: (1, Op)   o_ref: (TM, Op)
    h = jnp.dot(x_ref[...], w1_ref[...], preferred_element_type=jnp.float32)
    h = jnp.maximum(h + b1_ref[...].astype(jnp.float32), 0.0)
    acc = jnp.dot(h.astype(x_ref.dtype), w2_ref[...], preferred_element_type=jnp.float32)
    acc = acc + b2_ref[...].astype(jnp.float32)
    o_ref[...] = acc.astype(o_ref.dtype)


# ---------------------------------------------------------------------------
# Wrappers
# ---------------------------------------------------------------------------
def _row_tiled_call(kernel, x_p, weights_and_biases, out_cols, out_dtype,
                    tm, flops, extra_bytes):
    n_pad, _ = x_p.shape
    grid = (n_pad // tm,)
    x_bytes = jnp.dtype(x_p.dtype).itemsize

    in_specs = [pl.BlockSpec((tm, x_p.shape[1]), lambda i: (i, 0))]  # X tile, pipelined
    for arr in weights_and_biases:                                    # params resident
        in_specs.append(pl.BlockSpec(arr.shape, lambda i: (0, 0)))

    cost = pl.CostEstimate(
        flops=flops,
        transcendentals=0,
        bytes_accessed=(n_pad * x_p.shape[1] * x_bytes
                        + n_pad * out_cols * jnp.dtype(out_dtype).itemsize
                        + extra_bytes),
    )

    return pl.pallas_call(
        kernel,
        out_shape=jax.ShapeDtypeStruct((n_pad, out_cols), out_dtype),
        grid=grid,
        in_specs=in_specs,
        out_specs=pl.BlockSpec((tm, out_cols), lambda i: (i, 0)),
        compiler_params=pltpu.CompilerParams(
            dimension_semantics=("parallel",),        # megacore sharding (v7x)
            vmem_limit_bytes=64 * 1024 * 1024,
        ),
        cost_estimate=cost,
    )(x_p, *weights_and_biases)


def _pick_tm(n, vmem_resident_bytes, row_bytes, tile_rows):
    # Keep TM a multiple of 8; shrink if the double-buffered row tiles + resident
    # params would blow past a conservative 48 MiB working-set budget.
    tm = min(tile_rows, _round_up(max(n, 1), 8))
    budget = 48 * 1024 * 1024
    while tm > 8 and vmem_resident_bytes + 4 * tm * row_bytes > budget:
        tm //= 2
    return _round_up(max(tm, 8), 8)


def _pallas_linear(x, weight, bias, *, tile_rows=512):
    """y = x @ weight.T + bias.   x: [N, H], weight: [O, H], bias: [O] -> [N, O]."""
    n, h = x.shape
    o = weight.shape[0]
    out_dtype = x.dtype

    h_pad = _round_up(h, 128)
    o_pad = _round_up(o, 128)

    x_p = _pad_cols(x, h_pad)
    w_p = _pad_cols(jnp.pad(weight.T.astype(x.dtype), ((0, 0), (0, 0))), o_pad)
    w_p = jnp.pad(weight.T.astype(x.dtype), ((0, h_pad - h), (0, o_pad - o)))
    b_p = jnp.pad(bias.astype(jnp.float32), (0, o_pad - o)).reshape(1, o_pad)

    x_bytes = jnp.dtype(x.dtype).itemsize
    resident = h_pad * o_pad * x_bytes + o_pad * 4
    tm = _pick_tm(n, resident, (h_pad + o_pad) * x_bytes, tile_rows)

    n_pad = _round_up(max(n, 1), tm)
    x_p = jnp.pad(x_p, ((0, n_pad - n), (0, 0)))

    out = _row_tiled_call(
        _linear_kernel, x_p, [w_p, b_p], o_pad, out_dtype, tm,
        flops=2 * n_pad * h_pad * o_pad, extra_bytes=resident)
    return out[:n, :o]


def _pallas_mlp(x, w_hidden, b_hidden, w_out, b_out, *, tile_rows=512):
    """Fused Linear->ReLU->Linear.  x:[N,H], w_hidden:[D,H], w_out:[O,D] -> [N,O]."""
    n, h = x.shape
    d = w_hidden.shape[0]
    o = w_out.shape[0]
    out_dtype = x.dtype

    h_pad = _round_up(h, 128)
    d_pad = _round_up(d, 128)
    o_pad = _round_up(o, 128)

    x_p = _pad_cols(x, h_pad)
    w1_p = jnp.pad(w_hidden.T.astype(x.dtype), ((0, h_pad - h), (0, d_pad - d)))
    b1_p = jnp.pad(b_hidden.astype(jnp.float32), (0, d_pad - d)).reshape(1, d_pad)
    w2_p = jnp.pad(w_out.T.astype(x.dtype), ((0, d_pad - d), (0, o_pad - o)))
    b2_p = jnp.pad(b_out.astype(jnp.float32), (0, o_pad - o)).reshape(1, o_pad)

    x_bytes = jnp.dtype(x.dtype).itemsize
    resident = (h_pad * d_pad + d_pad * o_pad) * x_bytes + (d_pad + o_pad) * 4
    tm = _pick_tm(n, resident, (h_pad + d_pad + o_pad) * x_bytes, tile_rows)

    n_pad = _round_up(max(n, 1), tm)
    x_p = jnp.pad(x_p, ((0, n_pad - n), (0, 0)))

    out = _row_tiled_call(
        _mlp_kernel, x_p, [w1_p, b1_p, w2_p, b2_p], o_pad, out_dtype, tm,
        flops=2 * n_pad * (h_pad * d_pad + d_pad * o_pad), extra_bytes=resident)
    return out[:n, :o]


def classification_head(features, w_out, b_out, w_hidden=None, b_hidden=None,
                        tile_rows=512):
    """JAX/Pallas equivalent of ClassificationHead.forward (inference mode).

    features: [..., input_dim]
    Without hidden params: single Linear(input_dim -> num_classes).
    With hidden params:    Linear -> ReLU -> Dropout(eval: identity) -> Linear,
                           fused into one Pallas kernel.
    """
    lead = features.shape[:-1]
    h = features.shape[-1]
    x = features.reshape(-1, h)

    if w_hidden is not None:
        # TODO(synk): training-mode Dropout(p=0.1) not implemented; eval forward is identity.
        logits = _pallas_mlp(x, w_hidden, b_hidden, w_out, b_out, tile_rows=tile_rows)
    else:
        logits = _pallas_linear(x, w_out, b_out, tile_rows=tile_rows)

    return logits.reshape(*lead, w_out.shape[0])


if __name__ == "__main__":
    key = jax.random.PRNGKey(0)
    k1, k2, k3, k4, k5, k6 = jax.random.split(key, 6)

    B, S, H, C, HID = 2, 8, 64, 5, 32
    features = jax.random.normal(k1, (B, S, H), dtype=jnp.float32)

    bound = 1.0 / (H ** 0.5)
    w_out = jax.random.uniform(k2, (C, H), minval=-bound, maxval=bound, dtype=jnp.float32)
    b_out = jax.random.uniform(k3, (C,), minval=-bound, maxval=bound, dtype=jnp.float32)

    # Path 1: no hidden_dim -> classifier = Linear(H, C)
    logits = classification_head(features, w_out, b_out)
    logits = jax.block_until_ready(logits)
    ref = features @ w_out.T + b_out
    assert logits.shape == (B, S, C)
    assert jnp.allclose(logits, ref, atol=1e-5, rtol=1e-5)

    # Path 2: hidden_dim -> Linear -> ReLU -> Dropout(eval) -> Linear (fused kernel)
    w_hid = jax.random.uniform(k4, (HID, H), minval=-bound, maxval=bound, dtype=jnp.float32)
    b_hid = jax.random.uniform(k5, (HID,), minval=-bound, maxval=bound, dtype=jnp.float32)
    bound2 = 1.0 / (HID ** 0.5)
    w_out2 = jax.random.uniform(k6, (C, HID), minval=-bound2, maxval=bound2, dtype=jnp.float32)
    b_out2 = jnp.zeros((C,), dtype=jnp.float32)

    logits2 = classification_head(features, w_out2, b_out2,
                                  w_hidden=w_hid, b_hidden=b_hid)
    logits2 = jax.block_until_ready(logits2)
    hid_ref = jnp.maximum(features @ w_hid.T + b_hid, 0.0)
    ref2 = hid_ref @ w_out2.T + b_out2
    assert logits2.shape == (B, S, C)
    assert jnp.allclose(logits2, ref2, atol=1e-5, rtol=1e-5)

    print("KERNEL_OK")
</pallas_src>

<mosaic_0001>
module attributes {stable_mosaic.version = 11 : i64} {
  func.func @_linear_kernel(%arg0: i32, %arg1: memref<16x128xf32, #tpu.memory_space<vmem>>, %arg2: memref<128x128xf32, #tpu.memory_space<vmem>>, %arg3: memref<1x128xf32, #tpu.memory_space<vmem>>, %arg4: memref<16x128xf32, #tpu.memory_space<vmem>>) attributes {dimension_semantics = [#tpu.dimension_semantics<parallel>], iteration_bounds = array<i64: 1>, scalar_prefetch = 0 : i64, scratch_operands = 0 : i64, tpu.core_type = #tpu.core_type<tc>, window_params = [{transform_indices = @transform_0, window_bounds = array<i64: 16, 128>}, {pipeline_mode = #tpu.pipeline_mode<synchronous>, transform_indices = @transform_1, window_bounds = array<i64: 128, 128>}, {pipeline_mode = #tpu.pipeline_mode<synchronous>, transform_indices = @transform_2, window_bounds = array<i64: 1, 128>}, {transform_indices = @transform_3, window_bounds = array<i64: 16, 128>}]} {
    %c0 = arith.constant 0 : index
    %c0_0 = arith.constant 0 : index
    %0 = vector.load %arg1[%c0, %c0_0] : memref<16x128xf32, #tpu.memory_space<vmem>>, vector<16x128xf32>
    %c0_1 = arith.constant 0 : index
    %c0_2 = arith.constant 0 : index
    %1 = vector.load %arg2[%c0_1, %c0_2] : memref<128x128xf32, #tpu.memory_space<vmem>>, vector<128x128xf32>
    %cst = arith.constant dense<0.000000e+00> : vector<16x128xf32>
    %2 = tpu.matmul %0, %1, %cst {dimension_numbers = #tpu.dot_dimension_numbers<[1], [0], [0], [1], [0, 0, 1, 1], [], []>} : vector<16x128xf32>, vector<128x128xf32>, vector<16x128xf32> -> vector<16x128xf32>
    %c0_3 = arith.constant 0 : index
    %c0_4 = arith.constant 0 : index
    %3 = vector.load %arg3[%c0_3, %c0_4] : memref<1x128xf32, #tpu.memory_space<vmem>>, vector<1x128xf32>
    %4 = vector.broadcast %3 : vector<1x128xf32> to vector<16x128xf32>
    %5 = arith.addf %2, %4 : vector<16x128xf32>
    %c0_5 = arith.constant 0 : index
    %c0_6 = arith.constant 0 : index
    %6 = vector.load %arg4[%c0_5, %c0_6] : memref<16x128xf32, #tpu.memory_space<vmem>>, vector<16x128xf32>
    tpu.vector_store %arg4[%c0_5, %c0_6], %5 {strides = array<i32>} : memref<16x128xf32, #tpu.memory_space<vmem>>, vector<16x128xf32>,
    return
  }
  func.func @transform_0(%arg0: i32) -> (i32, i32) {
    %c0_i32 = arith.constant 0 : i32
    %c0_i32_0 = arith.constant 0 : i32
    return %arg0, %c0_i32 : i32, i32
  }
  func.func @transform_1(%arg0: i32) -> (i32, i32) {
    %c0_i32 = arith.constant 0 : i32
    %c0_i32_0 = arith.constant 0 : i32
    %c0_i32_1 = arith.constant 0 : i32
    return %c0_i32, %c0_i32_0 : i32, i32
  }
  func.func @transform_2(%arg0: i32) -> (i32, i32) {
    %c0_i32 = arith.constant 0 : i32
    %c0_i32_0 = arith.constant 0 : i32
    %c0_i32_1 = arith.constant 0 : i32
    return %c0_i32, %c0_i32_0 : i32, i32
  }
  func.func @transform_3(%arg0: i32) -> (i32, i32) {
    %c0_i32 = arith.constant 0 : i32
    %c0_i32_0 = arith.constant 0 : i32
    return %arg0, %c0_i32 : i32, i32
  }
}

</mosaic_0001>

<llo_original>
// kernel: tpu_custom_call.1
$region0: #{tpu_custom_call.1}
  #allocation0 [shape = 'u32[]', space=smem, size = 0x4, offset = 0x4, fixed_abs, tag = 'smem constant byte address 0x4 - core index']
  #allocation1 [shape = 'u32[144,128]{1,0:T(1,128)}', space=vmem, size = 0x12000, scoped, tag = 'internal scratch']
  %s0 = inlined_call_operand.hbm [shape: f32[16,128], index: 0, kind: input, shape index: {}]
  %s1 = inlined_call_operand.hbm [shape: f32[128,128], index: 1, kind: input, shape index: {}]
  %s2 = inlined_call_operand.hbm [shape: f32[1,128], index: 2, kind: input, shape index: {}]
  %s3 = inlined_call_operand.hbm [shape: f32[16,128], index: 3, kind: output, shape index: {}]
  %s4 = sld [smem:[#allocation0]]
  $region34: #{tpu_custom_call.1} parent=0
    _
  %s6 = ssub.s32 1, %s4
  %s7 = scalar_select 0, %s6, %s4
  $region1: #{tpu_custom_call.1} parent=0
    #allocation2 [shape = 'u8[8192]{0}', space=vmem, size = 0x2000, scoped, tag = 'input window, operand 0, single buffered']
    #allocation3 [shape = 's32[1]{0}', space=sflag, size = 0x4, scoped, tag = 'scoped memory for tpu_custom_call.1']
    #allocation4 [shape = 's32[1]{0}', space=sflag, size = 0x4, scoped, tag = 'scoped memory for tpu_custom_call.1']
    #allocation5 [shape = 'u8[65536]{0}', space=vmem, size = 0x10000, scoped, tag = 'input window, operand 1, single buffered']
    #allocation6 [shape = 's32[1]{0}', space=sflag, size = 0x4, scoped, tag = 'scoped memory for tpu_custom_call.1']
    #allocation7 [shape = 'u8[512]{0}', space=vmem, size = 0x400, scoped, tag = 'input window, operand 2, single buffered']
    #allocation8 [shape = 'u8[8192]{0}', space=vmem, size = 0x2000, scoped, tag = 'output window, operand 0, single buffered']
    %8 = vsyncpa [#allocation3], 0
    %9 = vsyncpa [#allocation6], 0
    %10 = vsyncpa [#allocation4], 0
    // Predicated region
    $region2: #{tpu_custom_call.1} parent=1 // pred_check
      _
    $region3: #{tpu_custom_call.1} parent=1 // pred_check_branch
      %12 = sbr.rel (0) target = $region5
    $region4: #{tpu_custom_call.1} parent=1 // pred_region
      %s14 = ssub.s32 256, 256
      %15 = vsyncadd [#allocation3], %s14
      %s16 = sshll.u32 [#allocation2], 4
      %s17 = int_to_ptr.vmem [resolvable:$true] %s16
      %22 = dma.hbm_to_vmem [thread:$0]  %s0, 256, %s17, [#allocation3], 128, 128, 8
    $region5: #{tpu_custom_call.1} parent=1 // pred_fallthru
      _
    // Predicated region
    $region6: #{tpu_custom_call.1} parent=1 // pred_check
      _
    $region7: #{tpu_custom_call.1} parent=1 // pred_check_branch
      %24 = sbr.rel (0) target = $region9
    $region8: #{tpu_custom_call.1} parent=1 // pred_region
      %s26 = ssub.s32 2048, 2048
      %27 = vsyncadd [#allocation6], %s26
      %s28 = sshll.u32 [#allocation5], 4
      %s29 = int_to_ptr.vmem [resolvable:$true] %s28
      %34 = dma.hbm_to_vmem [thread:$0]  %s1, 2048, %s29, [#allocation6], 128, 128, 8
    $region9: #{tpu_custom_call.1} parent=1 // pred_fallthru
      _
    // Predicated region
    $region10: #{tpu_custom_call.1} parent=1 // pred_check
      _
    $region11: #{tpu_custom_call.1} parent=1 // pred_check_branch
      %36 = sbr.rel (0) target = $region13
    $region12: #{tpu_custom_call.1} parent=1 // pred_region
      %s38 = ssub.s32 16, 16
      %39 = vsyncadd [#allocation6], %s38
      %s41 = sshll.u32 [#allocation7], 4
      %s42 = int_to_ptr.vmem [resolvable:$true] %s41
      %44 = dma.hbm_to_vmem [thread:$0]  %s2, 16, %s42, [#allocation6]
    $region13: #{tpu_custom_call.1} parent=1 // pred_fallthru
      _
    // Predicated region
    $region14: #{tpu_custom_call.1} parent=1 // pred_check
      _
    $region15: #{tpu_custom_call.1} parent=1 // pred_check_branch
      %46 = sbr.rel (0) target = $region17
    $region16: #{tpu_custom_call.1} parent=1 // pred_region
      %47 = dma.done [#allocation3], 256
    $region17: #{tpu_custom_call.1} parent=1 // pred_fallthru
      _
    // Predicated region
    $region18: #{tpu_custom_call.1} parent=1 // pred_check
      _
    $region19: #{tpu_custom_call.1} parent=1 // pred_check_branch
      %49 = sbr.rel (0) target = $region21
    $region20: #{tpu_custom_call.1} parent=1 // pred_region
      %50 = dma.done [#allocation6], 2048
    $region21: #{tpu_custom_call.1} parent=1 // pred_fallthru
      _
    // Predicated region
    $region22: #{tpu_custom_call.1} parent=1 // pred_check
      _
    $region23: #{tpu_custom_call.1} parent=1 // pred_check_branch
      %52 = sbr.rel (0) target = $region25
    $region24: #{tpu_custom_call.1} parent=1 // pred_region
      %53 = dma.done [#allocation6], 16
    $region25: #{tpu_custom_call.1} parent=1 // pred_fallthru
      _
    %v54 = vld [vmem:[#allocation2] sm:$0xff]
    %v55 = vld [vmem:[#allocation2 + $0x8] sm:$0xff]
    %v56 = vld [vmem:[#allocation5] sm:$0xff]
    %v57 = vld [vmem:[#allocation5 + $0x8] sm:$0xff]
    %v58 = vld [vmem:[#allocation5 + $0x10] sm:$0xff]
    %v59 = vld [vmem:[#allocation5 + $0x18] sm:$0xff]
    %v60 = vld [vmem:[#allocation5 + $0x20] sm:$0xff]
    %v61 = vld [vmem:[#allocation5 + $0x28] sm:$0xff]
    %v62 = vld [vmem:[#allocation5 + $0x30] sm:$0xff]
    %v63 = vld [vmem:[#allocation5 + $0x38] sm:$0xff]
    %v64 = vld [vmem:[#allocation5 + $0x40] sm:$0xff]
    %v65 = vld [vmem:[#allocation5 + $0x48] sm:$0xff]
    %v66 = vld [vmem:[#allocation5 + $0x50] sm:$0xff]
    %v67 = vld [vmem:[#allocation5 + $0x58] sm:$0xff]
    %v68 = vld [vmem:[#allocation5 + $0x60] sm:$0xff]
    %v69 = vld [vmem:[#allocation5 + $0x68] sm:$0xff]
    %v70 = vld [vmem:[#allocation5 + $0x70] sm:$0xff]
    %v71 = vld [vmem:[#allocation5 + $0x78] sm:$0xff]
    %v72 = vld [vmem:[#allocation7] sm:$0x1]
    %v74 = vlaneseq
    %v75 = vshrl.u32 %v74, 7
    %v76 = vsub.s32 0, %v75
    %v77 = vrot.slane %v72, %v76
    %79 = vmatprep.subr.mxu0 0.0
    %80 = vmatpush1.msra.mxu0 %v56
    %81 = vmatprep.subr.mxu0 0.0
    %82 = vmatpush1.msra.mxu0 %v57
    %83 = vmatprep.subr.mxu0 0.0
    %84 = vmatpush1.msra.mxu0 %v58
    %85 = vmatprep.subr.mxu0 0.0
    %86 = vmatpush1.msra.mxu0 %v59
    %87 = vmatprep.subr.mxu0 0.0
    %88 = vmatpush1.msra.mxu0 %v60
    %89 = vmatprep.subr.mxu0 0.0
    %90 = vmatpush1.msra.mxu0 %v61
    %91 = vmatprep.subr.mxu0 0.0
    %92 = vmatpush1.msra.mxu0 %v62
    %93 = vmatprep.subr.mxu0 0.0
    %94 = vmatpush1.msra.mxu0 %v63
    %95 = vmatprep.subr.mxu0 0.0
    %96 = vmatpush1.msra.mxu0 %v64
    %97 = vmatprep.subr.mxu0 0.0
    %98 = vmatpush1.msra.mxu0 %v65
    %99 = vmatprep.subr.mxu0 0.0
    %100 = vmatpush1.msra.mxu0 %v66
    %101 = vmatprep.subr.mxu0 0.0
    %102 = vmatpush1.msra.mxu0 %v67
    %103 = vmatprep.subr.mxu0 0.0
    %104 = vmatpush1.msra.mxu0 %v68
    %105 = vmatprep.subr.mxu0 0.0
    %106 = vmatpush1.msra.mxu0 %v69
    %107 = vmatprep.subr.mxu0 0.0
    %108 = vmatpush1.msra.mxu0 %v70
    %109 = vmatprep.subr.mxu0 0.0
    %110 = vmatpush1.msra.mxu0 %v71
    %111 = vmatprep.subr.mxu0 0.0
    %112 = vmatpush1.msra.mxu0 0.0
    %113 = vmatprep.subr.mxu0 0.0
    %114 = vmatpush1.msra.mxu0 0.0
    %115 = vmatprep.subr.mxu0 0.0
    %116 = vmatpush1.msra.mxu0 0.0
    %117 = vmatprep.subr.mxu0 0.0
    %118 = vmatpush1.msra.mxu0 0.0
    %119 = vmatprep.subr.mxu0 0.0
    %120 = vmatpush1.msra.mxu0 0.0
    %121 = vmatprep.subr.mxu0 0.0
    %122 = vmatpush1.msra.mxu0 0.0
    %123 = vmatprep.subr.mxu0 0.0
    %124 = vmatpush1.msra.mxu0 0.0
    %125 = vmatprep.subr.mxu0 0.0
    %126 = vmatpush1.msra.mxu0 0.0
    %127 = vmatprep.subr.mxu0 0.0
    %128 = vmatpush1.msra.mxu0 0.0
    %129 = vmatprep.subr.mxu0 0.0
    %130 = vmatpush1.msra.mxu0 0.0
    %131 = vmatprep.subr.mxu0 0.0
    %132 = vmatpush1.msra.mxu0 0.0
    %133 = vmatprep.subr.mxu0 0.0
    %134 = vmatpush1.msra.mxu0 0.0
    %135 = vmatprep.subr.mxu0 0.0
    %136 = vmatpush1.msra.mxu0 0.0
    %137 = vmatprep.subr.mxu0 0.0
    %138 = vmatpush1.msra.mxu0 0.0
    %139 = vmatprep.subr.mxu0 0.0
    %140 = vmatpush1.msra.mxu0 0.0
    %141 = vmatprep.subr.mxu0 0.0
    %142 = vmatpush1.msra.mxu0 0.0
    %143 = vmatprep.mubr.f32.mxu0 0.0
    %144 = vmatmul.mubr.f32.gmra.mrb[0].mxu0 %v54
    %v145 = vpop.f32.mrb[0].mxu0
    %v146 = vadd.f32 %v77, %v145
    %v147 = vpop.f32.mrb[0].mxu0
    %148 = vmatprep.mubr.f32.mxu0 0.0
    %149 = vmatmul.mubr.f32.gmra.mrb[0].mxu0 %v55
    %v150 = vpop.f32.mrb[0].mxu0
    %v151 = vadd.f32 %v77, %v150
    %v152 = vpop.f32.mrb[0].mxu0
    %153 = vdwg.mxu0
    %154 = vst [vmem:[#allocation8] sm:$0xff] %v146
    %155 = vst [vmem:[#allocation8 + $0x8] sm:$0xff] %v151
    // Predicated region
    $region26: #{tpu_custom_call.1} parent=1 // pred_check
      _
    $region27: #{tpu_custom_call.1} parent=1 // pred_check_branch
      %157 = sbr.rel (0) target = $region29
    $region28: #{tpu_custom_call.1} parent=1 // pred_region
      %s159 = ssub.s32 256, 256
      %160 = vsyncadd [#allocation4], %s159
      %s161 = sshll.u32 [#allocation8], 4
      %s162 = int_to_ptr.vmem [resolvable:$true] %s161
      %167 = dma.vmem_to_hbm [thread:$0]  %s162, 256, %s3, [#allocation4], 128, 128, 8
    $region29: #{tpu_custom_call.1} parent=1 // pred_fallthru
      _
    // Predicated region
    $region30: #{tpu_custom_call.1} parent=1 // pred_check
      _
    $region31: #{tpu_custom_call.1} parent=1 // pred_check_branch
      %169 = sbr.rel (0) target = $region33
    $region32: #{tpu_custom_call.1} parent=1 // pred_region
      %170 = dma.done [#allocation4], 256
    $region33: #{tpu_custom_call.1} parent=1 // pred_fallthru
      _
    %171 = vsyncpa [#allocation3], 1
    %172 = vsyncpa [#allocation6], 1
    %173 = vsyncpa [#allocation4], 1

</llo_original>
